<compile_context>
chip_gen: v7x
topology: tpu7x:2x2x1
jax: 0.10.0
libtpu: 0.0.40
codegen_flags: <defaults>
</compile_context>

<pallas_src>
import functools

import jax
import jax.numpy as jnp
from jax.experimental import pallas as pl
from jax.experimental.pallas import tpu as pltpu


# ---------------------------------------------------------------------------
# Kernel
#   x_ref   : (TB, 4)      int32   packed [row, col, value, board_size]
#   w_ref   : (4, 128, 128) f32    zero-padded weight slab (layer k in w_ref[k])
#   b_ref   : (4, 128)      f32    zero-padded biases
#   out_ref : (TB, 128)     f32    lane 0 = sigmoid(logit), other lanes dead
# ---------------------------------------------------------------------------
def box_constraint_kernel(x_ref, w_ref, b_ref, out_ref, *, inv_max_board_size):
    x = x_ref[...].astype(jnp.float32)            # (TB, 4)
    row = x[:, 0:1]
    col = x[:, 1:2]
    val = x[:, 2:3]
    bsz = x[:, 3:4]

    # box_size = int(sqrt(board_size)); trunc == floor for non-negative values.
    box_size = jnp.floor(jnp.sqrt(bsz))
    # Integer floor-division row // box_size, col // box_size (keep exact).
    box_row = jnp.floor(row / box_size)
    box_col = jnp.floor(col / box_size)

    # Normalization divides -> EUP approximate reciprocals (safe here).
    inv_bm1 = pl.reciprocal(box_size - 1.0, approx=True)
    inv_sm1 = pl.reciprocal(bsz - 1.0, approx=True)

    box_row_norm = box_row * inv_bm1              # (TB, 1)
    box_col_norm = box_col * inv_bm1              # (TB, 1)
    value_norm = (val - 1.0) * inv_sm1            # (TB, 1)
    size_norm = bsz * inv_max_board_size          # (TB, 1)

    # --- Layer 1: 4 -> 128 as VPU broadcast FMAs (no concat, no K=4 matmul) --
    w1 = w_ref[0]                                 # (128, 128); rows 0..3 = W1
    h = (box_row_norm * w1[0:1, :]
         + box_col_norm * w1[1:2, :]
         + value_norm * w1[2:3, :]
         + size_norm * w1[3:4, :]
         + b_ref[0:1, :])
    h = jnp.maximum(h, 0.0)                       # (TB, 128)

    # --- Layers 2-4: lane-aligned 128x128 MXU matmuls on zero-padded slabs ---
    h = jnp.dot(h, w_ref[1], preferred_element_type=jnp.float32) + b_ref[1:2, :]
    h = jnp.maximum(h, 0.0)
    h = jnp.dot(h, w_ref[2], preferred_element_type=jnp.float32) + b_ref[2:3, :]
    h = jnp.maximum(h, 0.0)
    logits = jnp.dot(h, w_ref[3], preferred_element_type=jnp.float32) + b_ref[3:4, :]

    # Lane-dense store: full (TB, 128); lane 0 is the real result
    # (dead lanes hold sigmoid(0) = 0.5 and are dropped in the wrapper).
    out_ref[...] = jax.nn.sigmoid(logits)


# ---------------------------------------------------------------------------
# Parameter init (same layer shapes as the nn.Linear layers in __init__).
# Weights stored as (in_dim, out_dim); biases as (out_dim,).
# ---------------------------------------------------------------------------
def init_params(key):
    dims = [(4, 128), (128, 64), (64, 32), (32, 1)]
    params = []
    for din, dout in dims:
        kw, kb, key = jax.random.split(key, 3)
        bound = float(din) ** -0.5
        w = jax.random.uniform(kw, (din, dout), jnp.float32, -bound, bound)
        b = jax.random.uniform(kb, (dout,), jnp.float32, -bound, bound)
        params.append((w, b))
    return params


def pack_params(params):
    """Zero-pad the 4 layers into one (4,128,128) weight slab + (4,128) biases."""
    w_slab = jnp.zeros((4, 128, 128), jnp.float32)
    b_slab = jnp.zeros((4, 128), jnp.float32)
    for k, (w, b) in enumerate(params):
        din, dout = w.shape
        w_slab = w_slab.at[k, :din, :dout].set(w)
        b_slab = b_slab.at[k, :dout].set(jnp.reshape(b, (-1,)))
    return w_slab, b_slab


def _round_up(n, m):
    return ((n + m - 1) // m) * m


# ---------------------------------------------------------------------------
# Wrapper
# ---------------------------------------------------------------------------
def box_constraint_forward(row, col, value, board, board_size,
                           w_slab, b_slab, max_board_size):
    del board  # unused in the reference forward pass; accepted for parity
    B = row.shape[0]

    # Pack the four scalar-per-row inputs into a single (B, 4) int32 array.
    packed = jnp.stack(
        [row.astype(jnp.int32), col.astype(jnp.int32),
         value.astype(jnp.int32), board_size.astype(jnp.int32)], axis=1)

    # Batch tiling: large tiles for big B (double-buffered, megacore-parallel),
    # a single padded-to-8 tile for tiny B.
    TB = 1024 if B >= 1024 else _round_up(max(B, 1), 8)
    Bp = _round_up(B, TB)
    if Bp != B:
        # Benign padding rows (board_size=4) so padded lanes stay finite.
        pad = jnp.tile(jnp.array([[0, 0, 1, 4]], dtype=jnp.int32), (Bp - B, 1))
        packed = jnp.concatenate([packed, pad], axis=0)

    kernel = functools.partial(
        box_constraint_kernel,
        inv_max_board_size=float(1.0 / float(max_board_size)))

    out = pl.pallas_call(
        kernel,
        out_shape=jax.ShapeDtypeStruct((Bp, 128), jnp.float32),
        grid=(Bp // TB,),
        in_specs=[
            pl.BlockSpec((TB, 4), lambda i: (i, 0)),          # packed inputs
            pl.BlockSpec((4, 128, 128), lambda i: (0, 0, 0)),  # weights (resident)
            pl.BlockSpec((4, 128), lambda i: (0, 0)),          # biases (resident)
        ],
        out_specs=pl.BlockSpec((TB, 128), lambda i: (i, 0)),
        compiler_params=pltpu.CompilerParams(
            dimension_semantics=("parallel",)),
    )(packed, w_slab, b_slab)

    # .squeeze() on the (B, 1) output of the reference -> (B,)
    return out[:B, 0]


if __name__ == "__main__":
    key = jax.random.PRNGKey(0)
    kp, kr, kc, kv = jax.random.split(key, 4)

    B = 8
    board_n = 9          # standard 9x9 sudoku board
    max_board_size = 9

    params = init_params(kp)
    w_slab, b_slab = pack_params(params)

    row = jax.random.randint(kr, (B,), 0, board_n, dtype=jnp.int32)
    col = jax.random.randint(kc, (B,), 0, board_n, dtype=jnp.int32)
    value = jax.random.randint(kv, (B,), 1, board_n + 1, dtype=jnp.int32)
    board = jnp.zeros((B, board_n, board_n), dtype=jnp.int32)  # unused in forward
    board_size = jnp.full((B,), board_n, dtype=jnp.int32)

    out = box_constraint_forward(row, col, value, board, board_size,
                                 w_slab, b_slab, max_board_size)
    out = jax.block_until_ready(out)

    assert out.shape == (B,), out.shape
    assert bool(jnp.all(jnp.isfinite(out)))
    assert bool(jnp.all((out > 0.0) & (out < 1.0)))
    print("KERNEL_OK")
</pallas_src>

<mosaic_0001>
module attributes {stable_mosaic.version = 11 : i64} {
  func.func @box_constraint_kernel(%arg0: i32, %arg1: memref<8x4xi32, #tpu.memory_space<vmem>>, %arg2: memref<4x128x128xf32, #tpu.memory_space<vmem>>, %arg3: memref<4x128xf32, #tpu.memory_space<vmem>>, %arg4: memref<8x128xf32, #tpu.memory_space<vmem>>) attributes {dimension_semantics = [#tpu.dimension_semantics<parallel>], iteration_bounds = array<i64: 1>, scalar_prefetch = 0 : i64, scratch_operands = 0 : i64, tpu.core_type = #tpu.core_type<tc>, window_params = [{transform_indices = @transform_0, window_bounds = array<i64: 8, 4>}, {pipeline_mode = #tpu.pipeline_mode<synchronous>, transform_indices = @transform_1, window_bounds = array<i64: 4, 128, 128>}, {pipeline_mode = #tpu.pipeline_mode<synchronous>, transform_indices = @transform_2, window_bounds = array<i64: 4, 128>}, {transform_indices = @transform_3, window_bounds = array<i64: 8, 128>}]} {
    %c0 = arith.constant 0 : index
    %c0_0 = arith.constant 0 : index
    %0 = vector.load %arg1[%c0, %c0_0] : memref<8x4xi32, #tpu.memory_space<vmem>>, vector<8x4xi32>
    %1 = arith.sitofp %0 : vector<8x4xi32> to vector<8x4xf32>
    %2 = vector.extract_strided_slice %1 {offsets = [0, 0], sizes = [8, 1], strides = [1, 1]} : vector<8x4xf32> to vector<8x1xf32>
    %3 = vector.extract_strided_slice %1 {offsets = [0, 1], sizes = [8, 1], strides = [1, 1]} : vector<8x4xf32> to vector<8x1xf32>
    %4 = vector.extract_strided_slice %1 {offsets = [0, 2], sizes = [8, 1], strides = [1, 1]} : vector<8x4xf32> to vector<8x1xf32>
    %5 = vector.extract_strided_slice %1 {offsets = [0, 3], sizes = [8, 1], strides = [1, 1]} : vector<8x4xf32> to vector<8x1xf32>
    %6 = math.sqrt %5 : vector<8x1xf32>
    %7 = math.floor %6 : vector<8x1xf32>
    %8 = arith.divf %2, %7 : vector<8x1xf32>
    %9 = math.floor %8 : vector<8x1xf32>
    %10 = arith.divf %3, %7 : vector<8x1xf32>
    %11 = math.floor %10 : vector<8x1xf32>
    %cst = arith.constant 1.000000e+00 : f32
    %12 = vector.broadcast %cst : f32 to vector<8x1xf32>
    %13 = arith.subf %7, %12 : vector<8x1xf32>
    %14 = tpu.reciprocal %13 {approx = true} : vector<8x1xf32> -> vector<8x1xf32>
    %cst_1 = arith.constant 1.000000e+00 : f32
    %15 = vector.broadcast %cst_1 : f32 to vector<8x1xf32>
    %16 = arith.subf %5, %15 : vector<8x1xf32>
    %17 = tpu.reciprocal %16 {approx = true} : vector<8x1xf32> -> vector<8x1xf32>
    %18 = arith.mulf %9, %14 : vector<8x1xf32>
    %19 = arith.mulf %11, %14 : vector<8x1xf32>
    %cst_2 = arith.constant 1.000000e+00 : f32
    %20 = vector.broadcast %cst_2 : f32 to vector<8x1xf32>
    %21 = arith.subf %4, %20 : vector<8x1xf32>
    %22 = arith.mulf %21, %17 : vector<8x1xf32>
    %cst_3 = arith.constant 0.111111112 : f32
    %23 = vector.broadcast %cst_3 : f32 to vector<8x1xf32>
    %24 = arith.mulf %5, %23 : vector<8x1xf32>
    %c0_4 = arith.constant 0 : index
    %c0_5 = arith.constant 0 : index
    %c0_6 = arith.constant 0 : index
    %25 = vector.load %arg2[%c0_4, %c0_5, %c0_6] : memref<4x128x128xf32, #tpu.memory_space<vmem>>, vector<1x128x128xf32>
    %26 = vector.shape_cast %25 : vector<1x128x128xf32> to vector<128x128xf32>
    %27 = vector.extract_strided_slice %26 {offsets = [0, 0], sizes = [1, 128], strides = [1, 1]} : vector<128x128xf32> to vector<1x128xf32>
    %28 = vector.broadcast %18 : vector<8x1xf32> to vector<8x128xf32>
    %29 = vector.broadcast %27 : vector<1x128xf32> to vector<8x128xf32>
    %30 = arith.mulf %28, %29 : vector<8x128xf32>
    %31 = vector.extract_strided_slice %26 {offsets = [1, 0], sizes = [1, 128], strides = [1, 1]} : vector<128x128xf32> to vector<1x128xf32>
    %32 = vector.broadcast %19 : vector<8x1xf32> to vector<8x128xf32>
    %33 = vector.broadcast %31 : vector<1x128xf32> to vector<8x128xf32>
    %34 = arith.mulf %32, %33 : vector<8x128xf32>
    %35 = arith.addf %30, %34 : vector<8x128xf32>
    %36 = vector.extract_strided_slice %26 {offsets = [2, 0], sizes = [1, 128], strides = [1, 1]} : vector<128x128xf32> to vector<1x128xf32>
    %37 = vector.broadcast %22 : vector<8x1xf32> to vector<8x128xf32>
    %38 = vector.broadcast %36 : vector<1x128xf32> to vector<8x128xf32>
    %39 = arith.mulf %37, %38 : vector<8x128xf32>
    %40 = arith.addf %35, %39 : vector<8x128xf32>
    %41 = vector.extract_strided_slice %26 {offsets = [3, 0], sizes = [1, 128], strides = [1, 1]} : vector<128x128xf32> to vector<1x128xf32>
    %42 = vector.broadcast %24 : vector<8x1xf32> to vector<8x128xf32>
    %43 = vector.broadcast %41 : vector<1x128xf32> to vector<8x128xf32>
    %44 = arith.mulf %42, %43 : vector<8x128xf32>
    %45 = arith.addf %40, %44 : vector<8x128xf32>
    %c0_7 = arith.constant 0 : index
    %c0_8 = arith.constant 0 : index
    %46 = vector.load %arg3[%c0_7, %c0_8] : memref<4x128xf32, #tpu.memory_space<vmem>>, vector<1x128xf32>
    %47 = vector.broadcast %46 : vector<1x128xf32> to vector<8x128xf32>
    %48 = arith.addf %45, %47 : vector<8x128xf32>
    %cst_9 = arith.constant 0.000000e+00 : f32
    %49 = vector.broadcast %cst_9 : f32 to vector<8x128xf32>
    %50 = arith.maximumf %48, %49 : vector<8x128xf32>
    %c1 = arith.constant 1 : index
    %c0_10 = arith.constant 0 : index
    %c0_11 = arith.constant 0 : index
    %51 = vector.load %arg2[%c1, %c0_10, %c0_11] : memref<4x128x128xf32, #tpu.memory_space<vmem>>, vector<1x128x128xf32>
    %52 = vector.shape_cast %51 : vector<1x128x128xf32> to vector<128x128xf32>
    %cst_12 = arith.constant dense<0.000000e+00> : vector<8x128xf32>
    %53 = tpu.matmul %50, %52, %cst_12 {dimension_numbers = #tpu.dot_dimension_numbers<[1], [0], [0], [1], [0, 0, 1, 1], [], []>} : vector<8x128xf32>, vector<128x128xf32>, vector<8x128xf32> -> vector<8x128xf32>
    %c1_13 = arith.constant 1 : index
    %c0_14 = arith.constant 0 : index
    %54 = vector.load %arg3[%c1_13, %c0_14] : memref<4x128xf32, #tpu.memory_space<vmem>>, vector<1x128xf32>
    %55 = vector.broadcast %54 : vector<1x128xf32> to vector<8x128xf32>
    %56 = arith.addf %53, %55 : vector<8x128xf32>
    %cst_15 = arith.constant 0.000000e+00 : f32
    %57 = vector.broadcast %cst_15 : f32 to vector<8x128xf32>
    %58 = arith.maximumf %56, %57 : vector<8x128xf32>
    %c2 = arith.constant 2 : index
    %c0_16 = arith.constant 0 : index
    %c0_17 = arith.constant 0 : index
    %59 = vector.load %arg2[%c2, %c0_16, %c0_17] : memref<4x128x128xf32, #tpu.memory_space<vmem>>, vector<1x128x128xf32>
    %60 = vector.shape_cast %59 : vector<1x128x128xf32> to vector<128x128xf32>
    %cst_18 = arith.constant dense<0.000000e+00> : vector<8x128xf32>
    %61 = tpu.matmul %58, %60, %cst_18 {dimension_numbers = #tpu.dot_dimension_numbers<[1], [0], [0], [1], [0, 0, 1, 1], [], []>} : vector<8x128xf32>, vector<128x128xf32>, vector<8x128xf32> -> vector<8x128xf32>
    %c2_19 = arith.constant 2 : index
    %c0_20 = arith.constant 0 : index
    %62 = vector.load %arg3[%c2_19, %c0_20] : memref<4x128xf32, #tpu.memory_space<vmem>>, vector<1x128xf32>
    %63 = vector.broadcast %62 : vector<1x128xf32> to vector<8x128xf32>
    %64 = arith.addf %61, %63 : vector<8x128xf32>
    %cst_21 = arith.constant 0.000000e+00 : f32
    %65 = vector.broadcast %cst_21 : f32 to vector<8x128xf32>
    %66 = arith.maximumf %64, %65 : vector<8x128xf32>
    %c3 = arith.constant 3 : index
    %c0_22 = arith.constant 0 : index
    %c0_23 = arith.constant 0 : index
    %67 = vector.load %arg2[%c3, %c0_22, %c0_23] : memref<4x128x128xf32, #tpu.memory_space<vmem>>, vector<1x128x128xf32>
    %68 = vector.shape_cast %67 : vector<1x128x128xf32> to vector<128x128xf32>
    %cst_24 = arith.constant dense<0.000000e+00> : vector<8x128xf32>
    %69 = tpu.matmul %66, %68, %cst_24 {dimension_numbers = #tpu.dot_dimension_numbers<[1], [0], [0], [1], [0, 0, 1, 1], [], []>} : vector<8x128xf32>, vector<128x128xf32>, vector<8x128xf32> -> vector<8x128xf32>
    %c3_25 = arith.constant 3 : index
    %c0_26 = arith.constant 0 : index
    %70 = vector.load %arg3[%c3_25, %c0_26] : memref<4x128xf32, #tpu.memory_space<vmem>>, vector<1x128xf32>
    %71 = vector.broadcast %70 : vector<1x128xf32> to vector<8x128xf32>
    %72 = arith.addf %69, %71 : vector<8x128xf32>
    %73 = arith.negf %72 : vector<8x128xf32>
    %74 = math.exp %73 : vector<8x128xf32>
    %cst_27 = arith.constant 1.000000e+00 : f32
    %75 = vector.broadcast %cst_27 : f32 to vector<8x128xf32>
    %76 = arith.addf %75, %74 : vector<8x128xf32>
    %77 = arith.divf %75, %76 : vector<8x128xf32>
    %c0_28 = arith.constant 0 : index
    %c0_29 = arith.constant 0 : index
    %78 = vector.load %arg4[%c0_28, %c0_29] : memref<8x128xf32, #tpu.memory_space<vmem>>, vector<8x128xf32>
    tpu.vector_store %arg4[%c0_28, %c0_29], %77 {strides = array<i32>} : memref<8x128xf32, #tpu.memory_space<vmem>>, vector<8x128xf32>,
    return
  }
  func.func @transform_0(%arg0: i32) -> (i32, i32) {
    %c0_i32 = arith.constant 0 : i32
    %c0_i32_0 = arith.constant 0 : i32
    return %arg0, %c0_i32 : i32, i32
  }
  func.func @transform_1(%arg0: i32) -> (i32, i32, i32) {
    %c0_i32 = arith.constant 0 : i32
    %c0_i32_0 = arith.constant 0 : i32
    %c0_i32_1 = arith.constant 0 : i32
    %c0_i32_2 = arith.constant 0 : i32
    return %c0_i32, %c0_i32_0, %c0_i32_1 : i32, i32, i32
  }
  func.func @transform_2(%arg0: i32) -> (i32, i32) {
    %c0_i32 = arith.constant 0 : i32
    %c0_i32_0 = arith.constant 0 : i32
    %c0_i32_1 = arith.constant 0 : i32
    return %c0_i32, %c0_i32_0 : i32, i32
  }
  func.func @transform_3(%arg0: i32) -> (i32, i32) {
    %c0_i32 = arith.constant 0 : i32
    %c0_i32_0 = arith.constant 0 : i32
    return %arg0, %c0_i32 : i32, i32
  }
}

</mosaic_0001>

<llo_original>
// kernel: tpu_custom_call.1
$region0: #{tpu_custom_call.1}
  #allocation0 [shape = 'u32[]', space=smem, size = 0x4, offset = 0x4, fixed_abs, tag = 'smem constant byte address 0x4 - core index']
  #allocation1 [shape = 'u32[144,128]{1,0:T(1,128)}', space=vmem, size = 0x12000, scoped, tag = 'internal scratch']
  %s0 = inlined_call_operand.vmem [shape: s32[8,4], index: 0, kind: input, shape index: {}]
  %s1 = inlined_call_operand.hbm [shape: f32[4,128,128], index: 1, kind: input, shape index: {}]
  %s2 = inlined_call_operand.vmem [shape: f32[4,128], index: 2, kind: input, shape index: {}]
  %s3 = inlined_call_operand.hbm [shape: f32[8,128], index: 3, kind: output, shape index: {}]
  %s4 = sld [smem:[#allocation0]]
  $region26: #{tpu_custom_call.1} parent=0
    _
  %s6 = ssub.s32 1, %s4
  %s7 = scalar_select 0, %s6, %s4
  $region1: #{tpu_custom_call.1} parent=0
    #allocation2 [shape = 'u8[262144]{0}', space=vmem, size = 0x40000, scoped, tag = 'input window, operand 1, single buffered']
    #allocation3 [shape = 's32[1]{0}', space=sflag, size = 0x4, scoped, tag = 'scoped memory for tpu_custom_call.1']
    #allocation4 [shape = 's32[1]{0}', space=sflag, size = 0x4, scoped, tag = 'scoped memory for tpu_custom_call.1']
    #allocation5 [shape = 'u8[4096]{0}', space=vmem, size = 0x1000, scoped, tag = 'output window, operand 0, single buffered']
    %8 = vsyncpa [#allocation3], 0
    %9 = vsyncpa [#allocation4], 0
    // Predicated region
    $region2: #{tpu_custom_call.1} parent=1 // pred_check
      _
    $region3: #{tpu_custom_call.1} parent=1 // pred_check_branch
      %11 = sbr.rel (0) target = $region5
    $region4: #{tpu_custom_call.1} parent=1 // pred_region
      _
    $region5: #{tpu_custom_call.1} parent=1 // pred_fallthru
      _
    // Predicated region
    $region6: #{tpu_custom_call.1} parent=1 // pred_check
      _
    $region7: #{tpu_custom_call.1} parent=1 // pred_check_branch
      %13 = sbr.rel (0) target = $region9
    $region8: #{tpu_custom_call.1} parent=1 // pred_region
      %s15 = ssub.s32 8192, 8192
      %16 = vsyncadd [#allocation3], %s15
      %s17 = sshll.u32 [#allocation2], 4
      %s18 = int_to_ptr.vmem [resolvable:$true] %s17
      %23 = dma.hbm_to_vmem [thread:$0]  %s1, 8192, %s18, [#allocation3], 128, 128, 8
    $region9: #{tpu_custom_call.1} parent=1 // pred_fallthru
      _
    // Predicated region
    $region10: #{tpu_custom_call.1} parent=1 // pred_check
      _
    $region11: #{tpu_custom_call.1} parent=1 // pred_check_branch
      %25 = sbr.rel (0) target = $region13
    $region12: #{tpu_custom_call.1} parent=1 // pred_region
      _
    $region13: #{tpu_custom_call.1} parent=1 // pred_fallthru
      _
    // Predicated region
    $region14: #{tpu_custom_call.1} parent=1 // pred_check
      _
    $region15: #{tpu_custom_call.1} parent=1 // pred_check_branch
      %27 = sbr.rel (0) target = $region17
    $region16: #{tpu_custom_call.1} parent=1 // pred_region
      %28 = dma.done [#allocation3], 8192
    $region17: #{tpu_custom_call.1} parent=1 // pred_fallthru
      _
    %v29 = vld [vmem:[%s0] sm:$0xff]
    %v30 = vcvt.s32.f32 %v29
    %v31 = vrsqrt.pop %v30
    %v32 = vmul.f32 %v30, %v31
    %vm33 = vcmp.eq.f32.partialorder %v30, inf
    %v34 = vsel %vm33, %v30, %v32
    %vm35 = vcmp.eq.f32.partialorder %v30, 0.0
    %v36 = vand.u32 %v30, 2147483648
    %v37 = vsel %vm35, %v36, %v34
    %v38 = vfloor.f32 %v37
    %40 = vrot.lane.b32.xlu0 %v38, 125
    %v41 = vpop.permute.xlu0 %40
    %v43 = vrcp.pop %v41
    %v44 = vmul.f32 %v30, %v43
    %v45 = vfloor.f32 %v44
    %46 = vrot.lane.b32.xlu0 %v38, 126
    %v47 = vpop.permute.xlu0 %46
    %v49 = vrcp.pop %v47
    %v50 = vmul.f32 %v30, %v49
    %v51 = vfloor.f32 %v50
    %v52 = vsub.f32 %v38, 1.0
    %v53 = vrcp.pop %v52
    %v54 = vsub.f32 %v30, 1.0
    %v55 = vrcp.pop %v54
    %57 = vrot.lane.b32.xlu0 %v53, 125
    %v58 = vpop.permute.xlu0 %57
    %v60 = vmul.f32 %v45, %v58
    %61 = vrot.lane.b32.xlu0 %v53, 126
    %v62 = vpop.permute.xlu0 %61
    %v64 = vmul.f32 %v51, %v62
    %66 = vrot.lane.b32.xlu0 %v55, 127
    %v67 = vpop.permute.xlu0 %66
    %v69 = vmul.f32 %v54, %v67
    %v70 = vmul.f32 %v30, 0.11111111
    %v71 = vld [vmem:[#allocation2] sm:$0xff]
    %73 = vset.pattern.permute.xlu0 0
    %74 = vperm.xlu0 %73, %v60
    %v75 = vpop.permute.xlu0 %74
    %v77 = vlaneseq
    %v78 = vshrl.u32 %v77, 7
    %v79 = vsub.s32 0, %v78
    %v80 = vrot.slane %v71, %v79
    %v81 = vmul.f32 %v75, %v80
    %83 = vset.pattern.permute.xlu0 1
    %84 = vperm.xlu0 %83, %v64
    %v85 = vpop.permute.xlu0 %84
    %v87 = vlaneseq
    %v88 = vshrl.u32 %v87, 7
    %v89 = vsub.s32 1, %v88
    %v90 = vrot.slane %v71, %v89
    %v91 = vmul.f32 %v85, %v90
    %v92 = vadd.f32 %v81, %v91
    %94 = vset.pattern.permute.xlu0 2
    %95 = vperm.xlu0 %94, %v69
    %v96 = vpop.permute.xlu0 %95
    %v98 = vlaneseq
    %v99 = vshrl.u32 %v98, 7
    %v100 = vsub.s32 2, %v99
    %v101 = vrot.slane %v71, %v100
    %v102 = vmul.f32 %v96, %v101
    %v103 = vadd.f32 %v92, %v102
    %105 = vset.pattern.permute.xlu0 3
    %106 = vperm.xlu0 %105, %v70
    %v107 = vpop.permute.xlu0 %106
    %v109 = vlaneseq
    %v110 = vshrl.u32 %v109, 7
    %v111 = vsub.s32 3, %v110
    %v112 = vrot.slane %v71, %v111
    %v113 = vmul.f32 %v107, %v112
    %v114 = vadd.f32 %v103, %v113
    %v115 = vld [vmem:[%s2] sm:$0x1]
    %v116 = vlaneseq
    %v117 = vshrl.u32 %v116, 7
    %v118 = vsub.s32 0, %v117
    %v119 = vrot.slane %v115, %v118
    %v120 = vadd.f32 %v114, %v119
    %v121 = vmax.f32 %v120, 0.0
    %s122 = scalar_lea.vmem [#allocation2], 128
    %v123 = vld [vmem:[%s122] sm:$0xff]
    %v124 = vld [vmem:[%s122 + $0x8] sm:$0xff]
    %v125 = vld [vmem:[%s122 + $0x10] sm:$0xff]
    %v126 = vld [vmem:[%s122 + $0x18] sm:$0xff]
    %v127 = vld [vmem:[%s122 + $0x20] sm:$0xff]
    %v128 = vld [vmem:[%s122 + $0x28] sm:$0xff]
    %v129 = vld [vmem:[%s122 + $0x30] sm:$0xff]
    %v130 = vld [vmem:[%s122 + $0x38] sm:$0xff]
    %v131 = vld [vmem:[%s122 + $0x40] sm:$0xff]
    %v132 = vld [vmem:[%s122 + $0x48] sm:$0xff]
    %v133 = vld [vmem:[%s122 + $0x50] sm:$0xff]
    %v134 = vld [vmem:[%s122 + $0x58] sm:$0xff]
    %v135 = vld [vmem:[%s122 + $0x60] sm:$0xff]
    %v136 = vld [vmem:[%s122 + $0x68] sm:$0xff]
    %v137 = vld [vmem:[%s122 + $0x70] sm:$0xff]
    %v138 = vld [vmem:[%s122 + $0x78] sm:$0xff]
    %v139 = vld [vmem:[%s2 + $0x1] sm:$0x1]
    %v140 = vlaneseq
    %v141 = vshrl.u32 %v140, 7
    %v142 = vsub.s32 0, %v141
    %v143 = vrot.slane %v139, %v142
    %144 = vmatprep.subr.mxu0 0.0
    %145 = vmatpush1.msra.mxu0 %v123
    %146 = vmatprep.subr.mxu0 0.0
    %147 = vmatpush1.msra.mxu0 %v124
    %148 = vmatprep.subr.mxu0 0.0
    %149 = vmatpush1.msra.mxu0 %v125
    %150 = vmatprep.subr.mxu0 0.0
    %151 = vmatpush1.msra.mxu0 %v126
    %152 = vmatprep.subr.mxu0 0.0
    %153 = vmatpush1.msra.mxu0 %v127
    %154 = vmatprep.subr.mxu0 0.0
    %155 = vmatpush1.msra.mxu0 %v128
    %156 = vmatprep.subr.mxu0 0.0
    %157 = vmatpush1.msra.mxu0 %v129
    %158 = vmatprep.subr.mxu0 0.0
    %159 = vmatpush1.msra.mxu0 %v130
    %160 = vmatprep.subr.mxu0 0.0
    %161 = vmatpush1.msra.mxu0 %v131
    %162 = vmatprep.subr.mxu0 0.0
    %163 = vmatpush1.msra.mxu0 %v132
    %164 = vmatprep.subr.mxu0 0.0
    %165 = vmatpush1.msra.mxu0 %v133
    %166 = vmatprep.subr.mxu0 0.0
    %167 = vmatpush1.msra.mxu0 %v134
    %168 = vmatprep.subr.mxu0 0.0
    %169 = vmatpush1.msra.mxu0 %v135
    %170 = vmatprep.subr.mxu0 0.0
    %171 = vmatpush1.msra.mxu0 %v136
    %172 = vmatprep.subr.mxu0 0.0
    %173 = vmatpush1.msra.mxu0 %v137
    %174 = vmatprep.subr.mxu0 0.0
    %175 = vmatpush1.msra.mxu0 %v138
    %176 = vmatprep.subr.mxu0 0.0
    %177 = vmatpush1.msra.mxu0 0.0
    %178 = vmatprep.subr.mxu0 0.0
    %179 = vmatpush1.msra.mxu0 0.0
    %180 = vmatprep.subr.mxu0 0.0
    %181 = vmatpush1.msra.mxu0 0.0
    %182 = vmatprep.subr.mxu0 0.0
    %183 = vmatpush1.msra.mxu0 0.0
    %184 = vmatprep.subr.mxu0 0.0
    %185 = vmatpush1.msra.mxu0 0.0
    %186 = vmatprep.subr.mxu0 0.0
    %187 = vmatpush1.msra.mxu0 0.0
    %188 = vmatprep.subr.mxu0 0.0
    %189 = vmatpush1.msra.mxu0 0.0
    %190 = vmatprep.subr.mxu0 0.0
    %191 = vmatpush1.msra.mxu0 0.0
    %192 = vmatprep.subr.mxu0 0.0
    %193 = vmatpush1.msra.mxu0 0.0
    %194 = vmatprep.subr.mxu0 0.0
    %195 = vmatpush1.msra.mxu0 0.0
    %196 = vmatprep.subr.mxu0 0.0
    %197 = vmatpush1.msra.mxu0 0.0
    %198 = vmatprep.subr.mxu0 0.0
    %199 = vmatpush1.msra.mxu0 0.0
    %200 = vmatprep.subr.mxu0 0.0
    %201 = vmatpush1.msra.mxu0 0.0
    %202 = vmatprep.subr.mxu0 0.0
    %203 = vmatpush1.msra.mxu0 0.0
    %204 = vmatprep.subr.mxu0 0.0
    %205 = vmatpush1.msra.mxu0 0.0
    %206 = vmatprep.subr.mxu0 0.0
    %207 = vmatpush1.msra.mxu0 0.0
    %208 = vmatprep.mubr.f32.mxu0 0.0
    %209 = vmatmul.mubr.f32.gmra.mrb[0].mxu0 %v121
    %v210 = vpop.f32.mrb[0].mxu0
    %v211 = vadd.f32 %v143, %v210
    %v212 = vpop.f32.mrb[0].mxu0
    %213 = vdwg.mxu0
    %v214 = vmax.f32 %v211, 0.0
    %s215 = scalar_lea.vmem [#allocation2], 256
    %v216 = vld [vmem:[%s215] sm:$0xff]
    %v217 = vld [vmem:[%s215 + $0x8] sm:$0xff]
    %v218 = vld [vmem:[%s215 + $0x10] sm:$0xff]
    %v219 = vld [vmem:[%s215 + $0x18] sm:$0xff]
    %v220 = vld [vmem:[%s215 + $0x20] sm:$0xff]
    %v221 = vld [vmem:[%s215 + $0x28] sm:$0xff]
    %v222 = vld [vmem:[%s215 + $0x30] sm:$0xff]
    %v223 = vld [vmem:[%s215 + $0x38] sm:$0xff]
    %v224 = vld [vmem:[%s215 + $0x40] sm:$0xff]
    %v225 = vld [vmem:[%s215 + $0x48] sm:$0xff]
    %v226 = vld [vmem:[%s215 + $0x50] sm:$0xff]
    %v227 = vld [vmem:[%s215 + $0x58] sm:$0xff]
    %v228 = vld [vmem:[%s215 + $0x60] sm:$0xff]
    %v229 = vld [vmem:[%s215 + $0x68] sm:$0xff]
    %v230 = vld [vmem:[%s215 + $0x70] sm:$0xff]
    %v231 = vld [vmem:[%s215 + $0x78] sm:$0xff]
    %v232 = vld [vmem:[%s2 + $0x2] sm:$0x1]
    %v233 = vlaneseq
    %v234 = vshrl.u32 %v233, 7
    %v235 = vsub.s32 0, %v234
    %v236 = vrot.slane %v232, %v235
    %237 = vmatprep.subr.mxu0 0.0
    %238 = vmatpush1.msra.mxu0 %v216
    %239 = vmatprep.subr.mxu0 0.0
    %240 = vmatpush1.msra.mxu0 %v217
    %241 = vmatprep.subr.mxu0 0.0
    %242 = vmatpush1.msra.mxu0 %v218
    %243 = vmatprep.subr.mxu0 0.0
    %244 = vmatpush1.msra.mxu0 %v219
    %245 = vmatprep.subr.mxu0 0.0
    %246 = vmatpush1.msra.mxu0 %v220
    %247 = vmatprep.subr.mxu0 0.0
    %248 = vmatpush1.msra.mxu0 %v221
    %249 = vmatprep.subr.mxu0 0.0
    %250 = vmatpush1.msra.mxu0 %v222
    %251 = vmatprep.subr.mxu0 0.0
    %252 = vmatpush1.msra.mxu0 %v223
    %253 = vmatprep.subr.mxu0 0.0
    %254 = vmatpush1.msra.mxu0 %v224
    %255 = vmatprep.subr.mxu0 0.0
    %256 = vmatpush1.msra.mxu0 %v225
    %257 = vmatprep.subr.mxu0 0.0
    %258 = vmatpush1.msra.mxu0 %v226
    %259 = vmatprep.subr.mxu0 0.0
    %260 = vmatpush1.msra.mxu0 %v227
    %261 = vmatprep.subr.mxu0 0.0
    %262 = vmatpush1.msra.mxu0 %v228
    %263 = vmatprep.subr.mxu0 0.0
    %264 = vmatpush1.msra.mxu0 %v229
    %265 = vmatprep.subr.mxu0 0.0
    %266 = vmatpush1.msra.mxu0 %v230
    %267 = vmatprep.subr.mxu0 0.0
    %268 = vmatpush1.msra.mxu0 %v231
    %269 = vmatprep.subr.mxu0 0.0
    %270 = vmatpush1.msra.mxu0 0.0
    %271 = vmatprep.subr.mxu0 0.0
    %272 = vmatpush1.msra.mxu0 0.0
    %273 = vmatprep.subr.mxu0 0.0
    %274 = vmatpush1.msra.mxu0 0.0
    %275 = vmatprep.subr.mxu0 0.0
    %276 = vmatpush1.msra.mxu0 0.0
    %277 = vmatprep.subr.mxu0 0.0
    %278 = vmatpush1.msra.mxu0 0.0
    %279 = vmatprep.subr.mxu0 0.0
    %280 = vmatpush1.msra.mxu0 0.0
    %281 = vmatprep.subr.mxu0 0.0
    %282 = vmatpush1.msra.mxu0 0.0
    %283 = vmatprep.subr.mxu0 0.0
    %284 = vmatpush1.msra.mxu0 0.0
    %285 = vmatprep.subr.mxu0 0.0
    %286 = vmatpush1.msra.mxu0 0.0
    %287 = vmatprep.subr.mxu0 0.0
    %288 = vmatpush1.msra.mxu0 0.0
    %289 = vmatprep.subr.mxu0 0.0
    %290 = vmatpush1.msra.mxu0 0.0
    %291 = vmatprep.subr.mxu0 0.0
    %292 = vmatpush1.msra.mxu0 0.0
    %293 = vmatprep.subr.mxu0 0.0
    %294 = vmatpush1.msra.mxu0 0.0
    %295 = vmatprep.subr.mxu0 0.0
    %296 = vmatpush1.msra.mxu0 0.0
    %297 = vmatprep.subr.mxu0 0.0
    %298 = vmatpush1.msra.mxu0 0.0
    %299 = vmatprep.subr.mxu0 0.0
    %300 = vmatpush1.msra.mxu0 0.0
    %301 = vmatprep.mubr.f32.mxu0 0.0
    %302 = vmatmul.mubr.f32.gmra.mrb[0].mxu0 %v214
    %v303 = vpop.f32.mrb[0].mxu0
    %v304 = vadd.f32 %v236, %v303
    %v305 = vpop.f32.mrb[0].mxu0
    %306 = vdwg.mxu0
    %v307 = vmax.f32 %v304, 0.0
    %s308 = scalar_lea.vmem [#allocation2], 384
    %v309 = vld [vmem:[%s308] sm:$0xff]
    %v310 = vld [vmem:[%s308 + $0x8] sm:$0xff]
    %v311 = vld [vmem:[%s308 + $0x10] sm:$0xff]
    %v312 = vld [vmem:[%s308 + $0x18] sm:$0xff]
    %v313 = vld [vmem:[%s308 + $0x20] sm:$0xff]
    %v314 = vld [vmem:[%s308 + $0x28] sm:$0xff]
    %v315 = vld [vmem:[%s308 + $0x30] sm:$0xff]
    %v316 = vld [vmem:[%s308 + $0x38] sm:$0xff]
    %v317 = vld [vmem:[%s308 + $0x40] sm:$0xff]
    %v318 = vld [vmem:[%s308 + $0x48] sm:$0xff]
    %v319 = vld [vmem:[%s308 + $0x50] sm:$0xff]
    %v320 = vld [vmem:[%s308 + $0x58] sm:$0xff]
    %v321 = vld [vmem:[%s308 + $0x60] sm:$0xff]
    %v322 = vld [vmem:[%s308 + $0x68] sm:$0xff]
    %v323 = vld [vmem:[%s308 + $0x70] sm:$0xff]
    %v324 = vld [vmem:[%s308 + $0x78] sm:$0xff]
    %v325 = vld [vmem:[%s2 + $0x3] sm:$0x1]
    %v326 = vlaneseq
    %v327 = vshrl.u32 %v326, 7
    %v328 = vsub.s32 0, %v327
    %v329 = vrot.slane %v325, %v328
    %330 = vmatprep.subr.mxu0 0.0
    %331 = vmatpush1.msra.mxu0 %v309
    %332 = vmatprep.subr.mxu0 0.0
    %333 = vmatpush1.msra.mxu0 %v310
    %334 = vmatprep.subr.mxu0 0.0
    %335 = vmatpush1.msra.mxu0 %v311
    %336 = vmatprep.subr.mxu0 0.0
    %337 = vmatpush1.msra.mxu0 %v312
    %338 = vmatprep.subr.mxu0 0.0
    %339 = vmatpush1.msra.mxu0 %v313
    %340 = vmatprep.subr.mxu0 0.0
    %341 = vmatpush1.msra.mxu0 %v314
    %342 = vmatprep.subr.mxu0 0.0
    %343 = vmatpush1.msra.mxu0 %v315
    %344 = vmatprep.subr.mxu0 0.0
    %345 = vmatpush1.msra.mxu0 %v316
    %346 = vmatprep.subr.mxu0 0.0
    %347 = vmatpush1.msra.mxu0 %v317
    %348 = vmatprep.subr.mxu0 0.0
    %349 = vmatpush1.msra.mxu0 %v318
    %350 = vmatprep.subr.mxu0 0.0
    %351 = vmatpush1.msra.mxu0 %v319
    %352 = vmatprep.subr.mxu0 0.0
    %353 = vmatpush1.msra.mxu0 %v320
    %354 = vmatprep.subr.mxu0 0.0
    %355 = vmatpush1.msra.mxu0 %v321
    %356 = vmatprep.subr.mxu0 0.0
    %357 = vmatpush1.msra.mxu0 %v322
    %358 = vmatprep.subr.mxu0 0.0
    %359 = vmatpush1.msra.mxu0 %v323
    %360 = vmatprep.subr.mxu0 0.0
    %361 = vmatpush1.msra.mxu0 %v324
    %362 = vmatprep.subr.mxu0 0.0
    %363 = vmatpush1.msra.mxu0 0.0
    %364 = vmatprep.subr.mxu0 0.0
    %365 = vmatpush1.msra.mxu0 0.0
    %366 = vmatprep.subr.mxu0 0.0
    %367 = vmatpush1.msra.mxu0 0.0
    %368 = vmatprep.subr.mxu0 0.0
    %369 = vmatpush1.msra.mxu0 0.0
    %370 = vmatprep.subr.mxu0 0.0
    %371 = vmatpush1.msra.mxu0 0.0
    %372 = vmatprep.subr.mxu0 0.0
    %373 = vmatpush1.msra.mxu0 0.0
    %374 = vmatprep.subr.mxu0 0.0
    %375 = vmatpush1.msra.mxu0 0.0
    %376 = vmatprep.subr.mxu0 0.0
    %377 = vmatpush1.msra.mxu0 0.0
    %378 = vmatprep.subr.mxu0 0.0
    %379 = vmatpush1.msra.mxu0 0.0
    %380 = vmatprep.subr.mxu0 0.0
    %381 = vmatpush1.msra.mxu0 0.0
    %382 = vmatprep.subr.mxu0 0.0
    %383 = vmatpush1.msra.mxu0 0.0
    %384 = vmatprep.subr.mxu0 0.0
    %385 = vmatpush1.msra.mxu0 0.0
    %386 = vmatprep.subr.mxu0 0.0
    %387 = vmatpush1.msra.mxu0 0.0
    %388 = vmatprep.subr.mxu0 0.0
    %389 = vmatpush1.msra.mxu0 0.0
    %390 = vmatprep.subr.mxu0 0.0
    %391 = vmatpush1.msra.mxu0 0.0
    %392 = vmatprep.subr.mxu0 0.0
    %393 = vmatpush1.msra.mxu0 0.0
    %394 = vmatprep.mubr.f32.mxu0 0.0
    %395 = vmatmul.mubr.f32.gmra.mrb[0].mxu0 %v307
    %v396 = vpop.f32.mrb[0].mxu0
    %v397 = vadd.f32 %v329, %v396
    %v398 = vpop.f32.mrb[0].mxu0
    %399 = vdwg.mxu0
    %v400 = vxor.u32 %v397, 2147483648
    %v401 = vmul.f32 %v400, 1.442695
    %v402 = vpow.pop %v401
    %v403 = vadd.f32 %v402, 1.0
    %v404 = vrcp.pop %v403
    %v405 = vmul.f32 1.0, %v404
    %406 = vst [vmem:[#allocation5] sm:$0xff] %v405
    // Predicated region
    $region18: #{tpu_custom_call.1} parent=1 // pred_check
      _
    $region19: #{tpu_custom_call.1} parent=1 // pred_check_branch
      %408 = sbr.rel (0) target = $region21
    $region20: #{tpu_custom_call.1} parent=1 // pred_region
      %s410 = ssub.s32 128, 128
      %411 = vsyncadd [#allocation4], %s410
      %s413 = sshll.u32 [#allocation5], 4
      %s414 = int_to_ptr.vmem [resolvable:$true] %s413
      %416 = dma.vmem_to_hbm [thread:$0]  %s414, 128, %s3, [#allocation4]
    $region21: #{tpu_custom_call.1} parent=1 // pred_fallthru
      _
    // Predicated region
    $region22: #{tpu_custom_call.1} parent=1 // pred_check
      _
    $region23: #{tpu_custom_call.1} parent=1 // pred_check_branch
      %418 = sbr.rel (0) target = $region25
    $region24: #{tpu_custom_call.1} parent=1 // pred_region
      %419 = dma.done [#allocation4], 128
    $region25: #{tpu_custom_call.1} parent=1 // pred_fallthru
      _
    %420 = vsyncpa [#allocation3], 1
    %421 = vsyncpa [#allocation4], 1

</llo_original>
